<compile_context>
chip_gen: v7x
topology: tpu7x:2x2x1
jax: 0.10.0
libtpu: 0.0.40
codegen_flags: <defaults>
</compile_context>

<pallas_src>
import functools
import math

import jax
import jax.numpy as jnp
from jax import lax
from jax.experimental import pallas as pl
from jax.experimental.pallas import tpu as pltpu

_BLOCK_M = 2048  # target key tile along M (power-of-two multiple of 128)


def _round_up(x, m):
    return ((x + m - 1) // m) * m


def _hard_attn_kernel(q_ref, k_ref, a_ref, v_hbm, enc_ref, idx_ref,
                      qw_ref, cand_v_ref, cand_i_ref, vrow_ref, gather_sem,
                      *, top_k, low_parameter, m_actual, m_pad, tm, cand_pad):
    blk = pl.program_id(0)
    n_blk = pl.num_programs(0)
    sentinel = m_pad  # > any real key index

    # ---- block 0: affine-transform the queries once; init running top-k ----
    @pl.when(blk == 0)
    def _():
        q = q_ref[...]
        if low_parameter:
            qw_ref[...] = (q * a_ref[...]).astype(qw_ref.dtype)      # diag(affine)
        else:
            qw_ref[...] = jnp.dot(
                q, a_ref[...], preferred_element_type=jnp.float32
            ).astype(qw_ref.dtype)
        cand_v_ref[...] = jnp.full((1, cand_pad), -jnp.inf, jnp.float32)
        cand_i_ref[...] = jnp.full((1, cand_pad), sentinel, jnp.int32)

    # ---- every block: MXU scores for this key tile, max over queries ----
    # 'nt' contraction: (n_pad, d_pad) x (tm, d_pad) -> (n_pad, tm), no
    # wrapper-side key transpose needed.
    s_nm = lax.dot_general(qw_ref[...], k_ref[...],
                           (((1,), (1,)), ((), ())),
                           preferred_element_type=jnp.float32)       # (n_pad, tm)
    s_row = jnp.max(s_nm, axis=0, keepdims=True)                     # (1, tm)
    gcol = blk * tm + lax.broadcasted_iota(jnp.int32, (1, tm), 1)    # global key idx
    if m_pad != m_actual:                    # static: skip mask when M is tile-aligned
        s_row = jnp.where(gcol < m_actual, s_row, -jnp.inf)

    # ---- streamed partial top-k: merge this tile into the running candidates ----
    cand_v = cand_v_ref[...]                                         # (1, cand_pad)
    cand_i = cand_i_ref[...]
    lane = lax.broadcasted_iota(jnp.int32, (1, cand_pad), 1)
    k_iota = lax.broadcasted_iota(jnp.int32, (1, top_k), 1)
    new_v = jnp.full((1, cand_pad), -jnp.inf, jnp.float32)
    new_i = jnp.full((1, cand_pad), sentinel, jnp.int32)
    out_v = jnp.zeros((1, top_k), jnp.float32)
    out_i = jnp.zeros((1, top_k), jnp.int32)
    for i in range(top_k):                   # top_k is static and small
        vmax = jnp.maximum(jnp.max(s_row, axis=1, keepdims=True),
                           jnp.max(cand_v, axis=1, keepdims=True))   # (1, 1)
        # ties -> smallest global index (across both the tile and the carry)
        sel = jnp.minimum(
            jnp.min(jnp.where(s_row == vmax, gcol, sentinel), axis=1, keepdims=True),
            jnp.min(jnp.where(cand_v == vmax, cand_i, sentinel), axis=1, keepdims=True))
        new_v = jnp.where(lane == i, vmax, new_v)
        new_i = jnp.where(lane == i, sel, new_i)
        out_v = jnp.where(k_iota == i, vmax, out_v)
        out_i = jnp.where(k_iota == i, sel, out_i)
        s_row = jnp.where(gcol == sel, -jnp.inf, s_row)
        cand_v = jnp.where(cand_i == sel, -jnp.inf, cand_v)
    cand_v_ref[...] = new_v
    cand_i_ref[...] = new_i

    # ---- last block: softmax over the k winners, gather k value rows, encode ----
    @pl.when(blk == n_blk - 1)
    def _():
        idx_ref[...] = out_i

        # Kick off the k row-gathers first so their latency hides under the
        # softmax.  Values never enter VMEM wholesale; traffic is k*V only.
        # TODO(synk): stage the addresses in an SMEM scratch to skip the
        # VMEM vst->vld round trip per row.
        copies = []
        for i in range(top_k):
            row = cand_i_ref[0, i]
            cp = pltpu.make_async_copy(v_hbm.at[pl.ds(row, 1), :],
                                       vrow_ref.at[i], gather_sem.at[i])
            cp.start()
            copies.append(cp)

        # batched softmax over the k selected scores (one exp, one sum)
        m0 = jnp.max(out_v, axis=1, keepdims=True)
        e = jnp.exp(out_v - m0)
        w = e / jnp.sum(e, axis=1, keepdims=True)                    # (1, top_k)

        for cp in copies:
            cp.wait()

        # weighted sum of the k gathered rows on the VPU
        acc = jnp.zeros((1, enc_ref.shape[1]), jnp.float32)
        for i in range(top_k):
            acc = acc + w[:, i:i + 1] * vrow_ref[i].astype(jnp.float32)
        enc_ref[...] = acc


def affine_multi_query_hard_attention(queries, values, keys, affine, *, k,
                                      low_parameter=True, use_bf16_keys=False):
    """JAX wrapper mirroring AffineMultiQueryHardAttentionEncoder.forward."""
    N, D = queries.shape
    M, V = values.shape
    assert keys.shape == (M, D)
    top_k = min(k, M)

    n_pad = _round_up(N, 8)
    d_pad = _round_up(D, 128)
    v_pad = _round_up(V, 128)
    cand_pad = _round_up(top_k, 128)

    key_dtype = jnp.bfloat16 if use_bf16_keys else keys.dtype
    qw_dtype = jnp.bfloat16 if use_bf16_keys else queries.dtype
    itemsize = jnp.dtype(key_dtype).itemsize

    # Generation-aware VMEM budget: v5e/v6e have 128 MiB per core, v7x has 64.
    try:
        vmem_cap = int(getattr(pltpu.get_tpu_info(), "vmem_capacity_bytes",
                               64 << 20))
    except Exception:
        vmem_cap = 64 << 20
    if vmem_cap >= (96 << 20):            # v5e / v6e
        key_db_budget = 24 << 20          # double-buffered key tile budget
        vmem_limit = 96 << 20
    else:                                 # v7x (or unknown -> conservative)
        key_db_budget = 16 << 20
        vmem_limit = 48 << 20

    # Key tile along M: multiple of 128, as large as the budget allows.
    tm = _BLOCK_M
    while tm > 128 and (tm > _round_up(M, 128)
                        or 2 * d_pad * tm * itemsize > key_db_budget):
        tm //= 2
    tm = max(tm, 128)
    m_pad = _round_up(M, tm)
    n_blk = m_pad // tm

    # Padding: zeros on D / V / M (padded key columns are masked in-kernel when
    # needed); the N padding repeats a real query row so max-over-queries is
    # unchanged.
    q_p = jnp.pad(queries, ((0, 0), (0, d_pad - D)))
    if n_pad > N:
        q_p = jnp.pad(q_p, ((0, n_pad - N), (0, 0)), mode="edge")
    k_p = jnp.pad(keys, ((0, m_pad - M), (0, d_pad - D)))         # (m_pad, d_pad)
    if use_bf16_keys:
        k_p = k_p.astype(jnp.bfloat16)
    v_p = jnp.pad(values, ((0, 0), (0, v_pad - V)))               # (M, v_pad)
    if low_parameter:
        a_p = jnp.pad(affine.reshape(1, D), ((0, 0), (0, d_pad - D)))
    else:
        a_p = jnp.pad(affine, ((0, d_pad - D), (0, d_pad - D)))

    kernel = functools.partial(_hard_attn_kernel, top_k=top_k,
                               low_parameter=low_parameter, m_actual=M,
                               m_pad=m_pad, tm=tm, cand_pad=cand_pad)

    grid_spec = pltpu.PrefetchScalarGridSpec(
        num_scalar_prefetch=0,
        grid=(n_blk,),
        in_specs=[
            pl.BlockSpec((n_pad, d_pad), lambda m: (0, 0)),   # queries (resident)
            # TODO(synk): sweep pipeline_mode=pl.Buffered(3) on keys for v7x.
            pl.BlockSpec((tm, d_pad), lambda m: (m, 0)),      # keys, tiled on M
            pl.BlockSpec(a_p.shape, lambda m: (0, 0)),        # affine (resident)
            pl.BlockSpec(memory_space=pl.ANY),                # values stay in HBM
        ],
        out_specs=(
            pl.BlockSpec((1, v_pad), lambda m: (0, 0)),
            pl.BlockSpec((1, top_k), lambda m: (0, 0)),
        ),
        scratch_shapes=[
            pltpu.VMEM((n_pad, d_pad), qw_dtype),             # Q @ W
            pltpu.VMEM((1, cand_pad), jnp.float32),           # running top-k vals
            pltpu.VMEM((1, cand_pad), jnp.int32),             # running top-k idx
            pltpu.VMEM((top_k, 1, v_pad), v_p.dtype),         # gathered value rows
            pltpu.SemaphoreType.DMA((top_k,)),
        ],
    )

    enc, idx = pl.pallas_call(
        kernel,
        out_shape=(jax.ShapeDtypeStruct((1, v_pad), jnp.float32),
                   jax.ShapeDtypeStruct((1, top_k), jnp.int32)),
        grid_spec=grid_spec,
        compiler_params=pltpu.CompilerParams(
            dimension_semantics=("arbitrary",),   # running carry: keep sequential
            vmem_limit_bytes=vmem_limit),
    )(q_p, k_p, a_p, v_p)
    # TODO(synk): on v7x, split the M scan across the two TensorCores (per-core
    # Q@W + per-core candidate scratch + a tiny merge); plain VMEM scratch is
    # not visible across cores so it needs its own merge step.
    return enc[0, :V], idx[0]


def _reference(queries, values, keys, affine, k, low_parameter):
    W = jnp.diag(affine) if low_parameter else affine
    scores = jnp.max(queries @ W @ keys.T, axis=0)
    top_k = min(k, scores.shape[0])
    w_vals, idx = jax.lax.top_k(scores, top_k)
    w = jax.nn.softmax(w_vals)
    enc = jnp.sum(w[:, None] * values[idx], axis=0)
    return enc, idx.astype(jnp.int32)


def _check(queries, values, keys, affine, k, low_parameter):
    enc, idx = affine_multi_query_hard_attention(
        queries, values, keys, affine, k=k, low_parameter=low_parameter)
    jax.block_until_ready((enc, idx))
    enc_r, idx_r = _reference(queries, values, keys, affine, k, low_parameter)
    assert jnp.array_equal(idx, idx_r), (idx, idx_r)
    assert jnp.allclose(enc, enc_r, atol=2e-4, rtol=2e-4), (enc, enc_r)


if __name__ == "__main__":
    key = jax.random.PRNGKey(0)
    kq, kk, kv, ka = jax.random.split(key, 4)

    # --- small shapes matching the module's intended use ---
    N, M, D, V, K = 8, 16, 32, 32, 4
    queries = jax.random.normal(kq, (N, D), jnp.float32)
    keys_arr = jax.random.normal(kk, (M, D), jnp.float32)
    values = jax.random.normal(kv, (M, V), jnp.float32)

    affine_lo = jnp.full((D,), math.sqrt(2.0), jnp.float32)        # nn.init.constant_
    _check(queries, values, keys_arr, affine_lo, K, True)

    bound = math.sqrt(2.0) * math.sqrt(6.0 / (D + D))              # xavier_uniform
    affine_full = jax.random.uniform(ka, (D, D), jnp.float32, -bound, bound)
    _check(queries, values, keys_arr, affine_full, K, False)

    # --- larger bag: exercises M tiling (several key blocks) and N/D/V padding ---
    N2, M2, D2, V2, K2 = 5, 300, 64, 48, 5
    kq2, kk2, kv2, ka2 = jax.random.split(jax.random.PRNGKey(1), 4)
    queries2 = jax.random.normal(kq2, (N2, D2), jnp.float32)
    keys2 = jax.random.normal(kk2, (M2, D2), jnp.float32)
    values2 = jax.random.normal(kv2, (M2, V2), jnp.float32)

    affine_lo2 = jnp.full((D2,), math.sqrt(2.0), jnp.float32)
    _check(queries2, values2, keys2, affine_lo2, K2, True)

    bound2 = math.sqrt(2.0) * math.sqrt(6.0 / (D2 + D2))
    affine_full2 = jax.random.uniform(ka2, (D2, D2), jnp.float32, -bound2, bound2)
    _check(queries2, values2, keys2, affine_full2, K2, False)

    print("KERNEL_OK")
</pallas_src>

<mosaic_0001>
module attributes {stable_mosaic.version = 11 : i64} {
  func.func @_hard_attn_kernel(%arg0: i32, %arg1: memref<8x128xf32, #tpu.memory_space<vmem>>, %arg2: memref<128x128xf32, #tpu.memory_space<vmem>>, %arg3: memref<1x128xf32, #tpu.memory_space<vmem>>, %arg4: memref<16x128xf32, #tpu.memory_space<any>>, %arg5: memref<1x128xf32, #tpu.memory_space<vmem>>, %arg6: memref<1x4xi32, #tpu.memory_space<vmem>>, %arg7: memref<8x128xf32, #tpu.memory_space<vmem>>, %arg8: memref<1x128xf32, #tpu.memory_space<vmem>>, %arg9: memref<1x128xi32, #tpu.memory_space<vmem>>, %arg10: memref<4x1x128xf32, #tpu.memory_space<vmem>>, %arg11: memref<4x!tpu.dma_semaphore, #tpu.memory_space<semaphore_mem>>) attributes {dimension_semantics = [#tpu.dimension_semantics<arbitrary>], iteration_bounds = array<i64: 1>, scalar_prefetch = 0 : i64, scratch_operands = 5 : i64, tpu.core_type = #tpu.core_type<tc>, window_params = [{pipeline_mode = #tpu.pipeline_mode<synchronous>, transform_indices = @transform_0, window_bounds = array<i64: 8, 128>}, {transform_indices = @transform_1, window_bounds = array<i64: 128, 128>}, {pipeline_mode = #tpu.pipeline_mode<synchronous>, transform_indices = @transform_2, window_bounds = array<i64: 1, 128>}, {}, {pipeline_mode = #tpu.pipeline_mode<synchronous>, transform_indices = @transform_4, window_bounds = array<i64: 1, 128>}, {pipeline_mode = #tpu.pipeline_mode<synchronous>, transform_indices = @transform_5, window_bounds = array<i64: 1, 4>}]} {
    %c0_i32 = arith.constant 0 : i32
    %0 = arith.cmpi eq, %arg0, %c0_i32 : i32
    %1 = arith.extui %0 : i1 to i32
    %c0_i32_0 = arith.constant 0 : i32
    %2 = arith.cmpi ne, %1, %c0_i32_0 : i32
    scf.if %2 {
      %c0_63 = arith.constant 0 : index
      %c0_64 = arith.constant 0 : index
      %205 = vector.load %arg1[%c0_63, %c0_64] : memref<8x128xf32, #tpu.memory_space<vmem>>, vector<8x128xf32>
      %c0_65 = arith.constant 0 : index
      %c0_66 = arith.constant 0 : index
      %206 = vector.load %arg3[%c0_65, %c0_66] : memref<1x128xf32, #tpu.memory_space<vmem>>, vector<1x128xf32>
      %207 = vector.broadcast %206 : vector<1x128xf32> to vector<8x128xf32>
      %208 = arith.mulf %205, %207 : vector<8x128xf32>
      %c0_67 = arith.constant 0 : index
      %c0_68 = arith.constant 0 : index
      %209 = vector.load %arg7[%c0_67, %c0_68] : memref<8x128xf32, #tpu.memory_space<vmem>>, vector<8x128xf32>
      tpu.vector_store %arg7[%c0_67, %c0_68], %208 {strides = array<i32>} : memref<8x128xf32, #tpu.memory_space<vmem>>, vector<8x128xf32>,
      %cst_69 = arith.constant 0xFF800000 : f32
      %210 = vector.broadcast %cst_69 : f32 to vector<1x128xf32>
      %c0_70 = arith.constant 0 : index
      %c0_71 = arith.constant 0 : index
      %211 = vector.load %arg8[%c0_70, %c0_71] : memref<1x128xf32, #tpu.memory_space<vmem>>, vector<1x128xf32>
      tpu.vector_store %arg8[%c0_70, %c0_71], %210 {strides = array<i32>} : memref<1x128xf32, #tpu.memory_space<vmem>>, vector<1x128xf32>,
      %c128_i32_72 = arith.constant 128 : i32
      %212 = vector.broadcast %c128_i32_72 : i32 to vector<1x128xi32>
      %c0_73 = arith.constant 0 : index
      %c0_74 = arith.constant 0 : index
      %213 = vector.load %arg9[%c0_73, %c0_74] : memref<1x128xi32, #tpu.memory_space<vmem>>, vector<1x128xi32>
      tpu.vector_store %arg9[%c0_73, %c0_74], %212 {strides = array<i32>} : memref<1x128xi32, #tpu.memory_space<vmem>>, vector<1x128xi32>,
    } else {
    }
    %c0 = arith.constant 0 : index
    %c0_1 = arith.constant 0 : index
    %3 = vector.load %arg7[%c0, %c0_1] : memref<8x128xf32, #tpu.memory_space<vmem>>, vector<8x128xf32>
    %c0_2 = arith.constant 0 : index
    %c0_3 = arith.constant 0 : index
    %4 = vector.load %arg2[%c0_2, %c0_3] : memref<128x128xf32, #tpu.memory_space<vmem>>, vector<128x128xf32>
    %cst = arith.constant dense<0.000000e+00> : vector<8x128xf32>
    %5 = tpu.matmul %3, %4, %cst {dimension_numbers = #tpu.dot_dimension_numbers<[1], [1], [0], [0], [0, 0, 1, 0], [], []>} : vector<8x128xf32>, vector<128x128xf32>, vector<8x128xf32> -> vector<8x128xf32>
    %cst_4 = arith.constant dense<0xFF800000> : vector<128xf32>
    %6 = vector.multi_reduction <maximumf>, %5, %cst_4 [0] : vector<8x128xf32> to vector<128xf32>
    %7 = vector.shape_cast %6 : vector<128xf32> to vector<1x128xf32>
    %c128_i32 = arith.constant 128 : i32
    %8 = arith.muli %arg0, %c128_i32 : i32
    %9 = tpu.iota {dimensions = array<i32: 1>} : vector<1x128xi32>
    %10 = vector.broadcast %8 : i32 to vector<1x128xi32>
    %11 = arith.addi %10, %9 : vector<1x128xi32>
    %c16_i32 = arith.constant 16 : i32
    %12 = vector.broadcast %c16_i32 : i32 to vector<1x128xi32>
    %13 = arith.cmpi slt, %11, %12 : vector<1x128xi32>
    %cst_5 = arith.constant 0xFF800000 : f32
    %14 = vector.broadcast %cst_5 : f32 to vector<1x128xf32>
    %15 = arith.select %13, %7, %14 : vector<1x128xi1>, vector<1x128xf32>
    %c0_6 = arith.constant 0 : index
    %c0_7 = arith.constant 0 : index
    %16 = vector.load %arg8[%c0_6, %c0_7] : memref<1x128xf32, #tpu.memory_space<vmem>>, vector<1x128xf32>
    %c0_8 = arith.constant 0 : index
    %c0_9 = arith.constant 0 : index
    %17 = vector.load %arg9[%c0_8, %c0_9] : memref<1x128xi32, #tpu.memory_space<vmem>>, vector<1x128xi32>
    %18 = tpu.iota {dimensions = array<i32: 1>} : vector<1x128xi32>
    %19 = tpu.iota {dimensions = array<i32: 1>} : vector<1x4xi32>
    %cst_10 = arith.constant 0xFF800000 : f32
    %20 = vector.broadcast %cst_10 : f32 to vector<1x128xf32>
    %c128_i32_11 = arith.constant 128 : i32
    %21 = vector.broadcast %c128_i32_11 : i32 to vector<1x128xi32>
    %cst_12 = arith.constant 0.000000e+00 : f32
    %22 = vector.broadcast %cst_12 : f32 to vector<1x4xf32>
    %c0_i32_13 = arith.constant 0 : i32
    %23 = vector.broadcast %c0_i32_13 : i32 to vector<1x4xi32>
    %cst_14 = arith.constant dense<0xFF800000> : vector<1xf32>
    %24 = vector.multi_reduction <maximumf>, %15, %cst_14 [1] : vector<1x128xf32> to vector<1xf32>
    %25 = vector.shape_cast %24 : vector<1xf32> to vector<1x1xf32>
    %cst_15 = arith.constant dense<0xFF800000> : vector<1xf32>
    %26 = vector.multi_reduction <maximumf>, %16, %cst_15 [1] : vector<1x128xf32> to vector<1xf32>
    %27 = vector.shape_cast %26 : vector<1xf32> to vector<1x1xf32>
    %28 = arith.maximumf %25, %27 : vector<1x1xf32>
    %29 = vector.broadcast %28 : vector<1x1xf32> to vector<1x128xf32>
    %30 = arith.cmpf oeq, %15, %29 : vector<1x128xf32>
    %c128_i32_16 = arith.constant 128 : i32
    %31 = vector.broadcast %c128_i32_16 : i32 to vector<1x128xi32>
    %32 = arith.select %30, %11, %31 : vector<1x128xi1>, vector<1x128xi32>
    %cst_17 = arith.constant dense<2147483647> : vector<1xi32>
    %33 = vector.multi_reduction <minsi>, %32, %cst_17 [1] : vector<1x128xi32> to vector<1xi32>
    %34 = vector.shape_cast %33 : vector<1xi32> to vector<1x1xi32>
    %35 = vector.broadcast %28 : vector<1x1xf32> to vector<1x128xf32>
    %36 = arith.cmpf oeq, %16, %35 : vector<1x128xf32>
    %c128_i32_18 = arith.constant 128 : i32
    %37 = vector.broadcast %c128_i32_18 : i32 to vector<1x128xi32>
    %38 = arith.select %36, %17, %37 : vector<1x128xi1>, vector<1x128xi32>
    %cst_19 = arith.constant dense<2147483647> : vector<1xi32>
    %39 = vector.multi_reduction <minsi>, %38, %cst_19 [1] : vector<1x128xi32> to vector<1xi32>
    %40 = vector.shape_cast %39 : vector<1xi32> to vector<1x1xi32>
    %41 = arith.minsi %34, %40 : vector<1x1xi32>
    %c0_i32_20 = arith.constant 0 : i32
    %42 = vector.broadcast %c0_i32_20 : i32 to vector<1x128xi32>
    %43 = arith.cmpi eq, %18, %42 : vector<1x128xi32>
    %44 = vector.shape_cast %28 : vector<1x1xf32> to vector<1x1xf32>
    %45 = vector.broadcast %44 : vector<1x1xf32> to vector<1x128xf32>
    %46 = arith.select %43, %45, %20 : vector<1x128xi1>, vector<1x128xf32>
    %c0_i32_21 = arith.constant 0 : i32
    %47 = vector.broadcast %c0_i32_21 : i32 to vector<1x128xi32>
    %48 = arith.cmpi eq, %18, %47 : vector<1x128xi32>
    %49 = vector.shape_cast %41 : vector<1x1xi32> to vector<1x1xi32>
    %50 = vector.broadcast %49 : vector<1x1xi32> to vector<1x128xi32>
    %51 = arith.select %48, %50, %21 : vector<1x128xi1>, vector<1x128xi32>
    %c0_i32_22 = arith.constant 0 : i32
    %52 = vector.broadcast %c0_i32_22 : i32 to vector<1x4xi32>
    %53 = arith.cmpi eq, %19, %52 : vector<1x4xi32>
    %54 = vector.shape_cast %28 : vector<1x1xf32> to vector<1x1xf32>
    %55 = vector.broadcast %54 : vector<1x1xf32> to vector<1x4xf32>
    %56 = arith.select %53, %55, %22 : vector<1x4xi1>, vector<1x4xf32>
    %c0_i32_23 = arith.constant 0 : i32
    %57 = vector.broadcast %c0_i32_23 : i32 to vector<1x4xi32>
    %58 = arith.cmpi eq, %19, %57 : vector<1x4xi32>
    %59 = vector.shape_cast %41 : vector<1x1xi32> to vector<1x1xi32>
    %60 = vector.broadcast %59 : vector<1x1xi32> to vector<1x4xi32>
    %61 = arith.select %58, %60, %23 : vector<1x4xi1>, vector<1x4xi32>
    %62 = vector.broadcast %41 : vector<1x1xi32> to vector<1x128xi32>
    %63 = arith.cmpi eq, %11, %62 : vector<1x128xi32>
    %cst_24 = arith.constant 0xFF800000 : f32
    %64 = vector.broadcast %cst_24 : f32 to vector<1x128xf32>
    %65 = arith.select %63, %64, %15 : vector<1x128xi1>, vector<1x128xf32>
    %66 = vector.broadcast %41 : vector<1x1xi32> to vector<1x128xi32>
    %67 = arith.cmpi eq, %17, %66 : vector<1x128xi32>
    %cst_25 = arith.constant 0xFF800000 : f32
    %68 = vector.broadcast %cst_25 : f32 to vector<1x128xf32>
    %69 = arith.select %67, %68, %16 : vector<1x128xi1>, vector<1x128xf32>
    %cst_26 = arith.constant dense<0xFF800000> : vector<1xf32>
    %70 = vector.multi_reduction <maximumf>, %65, %cst_26 [1] : vector<1x128xf32> to vector<1xf32>
    %71 = vector.shape_cast %70 : vector<1xf32> to vector<1x1xf32>
    %cst_27 = arith.constant dense<0xFF800000> : vector<1xf32>
    %72 = vector.multi_reduction <maximumf>, %69, %cst_27 [1] : vector<1x128xf32> to vector<1xf32>
    %73 = vector.shape_cast %72 : vector<1xf32> to vector<1x1xf32>
    %74 = arith.maximumf %71, %73 : vector<1x1xf32>
    %75 = vector.broadcast %74 : vector<1x1xf32> to vector<1x128xf32>
    %76 = arith.cmpf oeq, %65, %75 : vector<1x128xf32>
    %c128_i32_28 = arith.constant 128 : i32
    %77 = vector.broadcast %c128_i32_28 : i32 to vector<1x128xi32>
    %78 = arith.select %76, %11, %77 : vector<1x128xi1>, vector<1x128xi32>
    %cst_29 = arith.constant dense<2147483647> : vector<1xi32>
    %79 = vector.multi_reduction <minsi>, %78, %cst_29 [1] : vector<1x128xi32> to vector<1xi32>
    %80 = vector.shape_cast %79 : vector<1xi32> to vector<1x1xi32>
    %81 = vector.broadcast %74 : vector<1x1xf32> to vector<1x128xf32>
    %82 = arith.cmpf oeq, %69, %81 : vector<1x128xf32>
    %c128_i32_30 = arith.constant 128 : i32
    %83 = vector.broadcast %c128_i32_30 : i32 to vector<1x128xi32>
    %84 = arith.select %82, %17, %83 : vector<1x128xi1>, vector<1x128xi32>
    %cst_31 = arith.constant dense<2147483647> : vector<1xi32>
    %85 = vector.multi_reduction <minsi>, %84, %cst_31 [1] : vector<1x128xi32> to vector<1xi32>
    %86 = vector.shape_cast %85 : vector<1xi32> to vector<1x1xi32>
    %87 = arith.minsi %80, %86 : vector<1x1xi32>
    %c1_i32 = arith.constant 1 : i32
    %88 = vector.broadcast %c1_i32 : i32 to vector<1x128xi32>
    %89 = arith.cmpi eq, %18, %88 : vector<1x128xi32>
    %90 = vector.shape_cast %74 : vector<1x1xf32> to vector<1x1xf32>
    %91 = vector.broadcast %90 : vector<1x1xf32> to vector<1x128xf32>
    %92 = arith.select %89, %91, %46 : vector<1x128xi1>, vector<1x128xf32>
    %c1_i32_32 = arith.constant 1 : i32
    %93 = vector.broadcast %c1_i32_32 : i32 to vector<1x128xi32>
    %94 = arith.cmpi eq, %18, %93 : vector<1x128xi32>
    %95 = vector.shape_cast %87 : vector<1x1xi32> to vector<1x1xi32>
    %96 = vector.broadcast %95 : vector<1x1xi32> to vector<1x128xi32>
    %97 = arith.select %94, %96, %51 : vector<1x128xi1>, vector<1x128xi32>
    %c1_i32_33 = arith.constant 1 : i32
    %98 = vector.broadcast %c1_i32_33 : i32 to vector<1x4xi32>
    %99 = arith.cmpi eq, %19, %98 : vector<1x4xi32>
    %100 = vector.shape_cast %74 : vector<1x1xf32> to vector<1x1xf32>
    %101 = vector.broadcast %100 : vector<1x1xf32> to vector<1x4xf32>
    %102 = arith.select %99, %101, %56 : vector<1x4xi1>, vector<1x4xf32>
    %c1_i32_34 = arith.constant 1 : i32
    %103 = vector.broadcast %c1_i32_34 : i32 to vector<1x4xi32>
    %104 = arith.cmpi eq, %19, %103 : vector<1x4xi32>
    %105 = vector.shape_cast %87 : vector<1x1xi32> to vector<1x1xi32>
    %106 = vector.broadcast %105 : vector<1x1xi32> to vector<1x4xi32>
    %107 = arith.select %104, %106, %61 : vector<1x4xi1>, vector<1x4xi32>
    %108 = vector.broadcast %87 : vector<1x1xi32> to vector<1x128xi32>
    %109 = arith.cmpi eq, %11, %108 : vector<1x128xi32>
    %cst_35 = arith.constant 0xFF800000 : f32
    %110 = vector.broadcast %cst_35 : f32 to vector<1x128xf32>
    %111 = arith.select %109, %110, %65 : vector<1x128xi1>, vector<1x128xf32>
    %112 = vector.broadcast %87 : vector<1x1xi32> to vector<1x128xi32>
    %113 = arith.cmpi eq, %17, %112 : vector<1x128xi32>
    %cst_36 = arith.constant 0xFF800000 : f32
    %114 = vector.broadcast %cst_36 : f32 to vector<1x128xf32>
    %115 = arith.select %113, %114, %69 : vector<1x128xi1>, vector<1x128xf32>
    %cst_37 = arith.constant dense<0xFF800000> : vector<1xf32>
    %116 = vector.multi_reduction <maximumf>, %111, %cst_37 [1] : vector<1x128xf32> to vector<1xf32>
    %117 = vector.shape_cast %116 : vector<1xf32> to vector<1x1xf32>
    %cst_38 = arith.constant dense<0xFF800000> : vector<1xf32>
    %118 = vector.multi_reduction <maximumf>, %115, %cst_38 [1] : vector<1x128xf32> to vector<1xf32>
    %119 = vector.shape_cast %118 : vector<1xf32> to vector<1x1xf32>
    %120 = arith.maximumf %117, %119 : vector<1x1xf32>
    %121 = vector.broadcast %120 : vector<1x1xf32> to vector<1x128xf32>
    %122 = arith.cmpf oeq, %111, %121 : vector<1x128xf32>
    %c128_i32_39 = arith.constant 128 : i32
    %123 = vector.broadcast %c128_i32_39 : i32 to vector<1x128xi32>
    %124 = arith.select %122, %11, %123 : vector<1x128xi1>, vector<1x128xi32>
    %cst_40 = arith.constant dense<2147483647> : vector<1xi32>
    %125 = vector.multi_reduction <minsi>, %124, %cst_40 [1] : vector<1x128xi32> to vector<1xi32>
    %126 = vector.shape_cast %125 : vector<1xi32> to vector<1x1xi32>
    %127 = vector.broadcast %120 : vector<1x1xf32> to vector<1x128xf32>
    %128 = arith.cmpf oeq, %115, %127 : vector<1x128xf32>
    %c128_i32_41 = arith.constant 128 : i32
    %129 = vector.broadcast %c128_i32_41 : i32 to vector<1x128xi32>
    %130 = arith.select %128, %17, %129 : vector<1x128xi1>, vector<1x128xi32>
    %cst_42 = arith.constant dense<2147483647> : vector<1xi32>
    %131 = vector.multi_reduction <minsi>, %130, %cst_42 [1] : vector<1x128xi32> to vector<1xi32>
    %132 = vector.shape_cast %131 : vector<1xi32> to vector<1x1xi32>
    %133 = arith.minsi %126, %132 : vector<1x1xi32>
    %c2_i32 = arith.constant 2 : i32
    %134 = vector.broadcast %c2_i32 : i32 to vector<1x128xi32>
    %135 = arith.cmpi eq, %18, %134 : vector<1x128xi32>
    %136 = vector.shape_cast %120 : vector<1x1xf32> to vector<1x1xf32>
    %137 = vector.broadcast %136 : vector<1x1xf32> to vector<1x128xf32>
    %138 = arith.select %135, %137, %92 : vector<1x128xi1>, vector<1x128xf32>
    %c2_i32_43 = arith.constant 2 : i32
    %139 = vector.broadcast %c2_i32_43 : i32 to vector<1x128xi32>
    %140 = arith.cmpi eq, %18, %139 : vector<1x128xi32>
    %141 = vector.shape_cast %133 : vector<1x1xi32> to vector<1x1xi32>
    %142 = vector.broadcast %141 : vector<1x1xi32> to vector<1x128xi32>
    %143 = arith.select %140, %142, %97 : vector<1x128xi1>, vector<1x128xi32>
    %c2_i32_44 = arith.constant 2 : i32
    %144 = vector.broadcast %c2_i32_44 : i32 to vector<1x4xi32>
    %145 = arith.cmpi eq, %19, %144 : vector<1x4xi32>
    %146 = vector.shape_cast %120 : vector<1x1xf32> to vector<1x1xf32>
    %147 = vector.broadcast %146 : vector<1x1xf32> to vector<1x4xf32>
    %148 = arith.select %145, %147, %102 : vector<1x4xi1>, vector<1x4xf32>
    %c2_i32_45 = arith.constant 2 : i32
    %149 = vector.broadcast %c2_i32_45 : i32 to vector<1x4xi32>
    %150 = arith.cmpi eq, %19, %149 : vector<1x4xi32>
    %151 = vector.shape_cast %133 : vector<1x1xi32> to vector<1x1xi32>
    %152 = vector.broadcast %151 : vector<1x1xi32> to vector<1x4xi32>
    %153 = arith.select %150, %152, %107 : vector<1x4xi1>, vector<1x4xi32>
    %154 = vector.broadcast %133 : vector<1x1xi32> to vector<1x128xi32>
    %155 = arith.cmpi eq, %11, %154 : vector<1x128xi32>
    %cst_46 = arith.constant 0xFF800000 : f32
    %156 = vector.broadcast %cst_46 : f32 to vector<1x128xf32>
    %157 = arith.select %155, %156, %111 : vector<1x128xi1>, vector<1x128xf32>
    %158 = vector.broadcast %133 : vector<1x1xi32> to vector<1x128xi32>
    %159 = arith.cmpi eq, %17, %158 : vector<1x128xi32>
    %cst_47 = arith.constant 0xFF800000 : f32
    %160 = vector.broadcast %cst_47 : f32 to vector<1x128xf32>
    %161 = arith.select %159, %160, %115 : vector<1x128xi1>, vector<1x128xf32>
    %cst_48 = arith.constant dense<0xFF800000> : vector<1xf32>
    %162 = vector.multi_reduction <maximumf>, %157, %cst_48 [1] : vector<1x128xf32> to vector<1xf32>
    %163 = vector.shape_cast %162 : vector<1xf32> to vector<1x1xf32>
    %cst_49 = arith.constant dense<0xFF800000> : vector<1xf32>
    %164 = vector.multi_reduction <maximumf>, %161, %cst_49 [1] : vector<1x128xf32> to vector<1xf32>
    %165 = vector.shape_cast %164 : vector<1xf32> to vector<1x1xf32>
    %166 = arith.maximumf %163, %165 : vector<1x1xf32>
    %167 = vector.broadcast %166 : vector<1x1xf32> to vector<1x128xf32>
    %168 = arith.cmpf oeq, %157, %167 : vector<1x128xf32>
    %c128_i32_50 = arith.constant 128 : i32
    %169 = vector.broadcast %c128_i32_50 : i32 to vector<1x128xi32>
    %170 = arith.select %168, %11, %169 : vector<1x128xi1>, vector<1x128xi32>
    %cst_51 = arith.constant dense<2147483647> : vector<1xi32>
    %171 = vector.multi_reduction <minsi>, %170, %cst_51 [1] : vector<1x128xi32> to vector<1xi32>
    %172 = vector.shape_cast %171 : vector<1xi32> to vector<1x1xi32>
    %173 = vector.broadcast %166 : vector<1x1xf32> to vector<1x128xf32>
    %174 = arith.cmpf oeq, %161, %173 : vector<1x128xf32>
    %c128_i32_52 = arith.constant 128 : i32
    %175 = vector.broadcast %c128_i32_52 : i32 to vector<1x128xi32>
    %176 = arith.select %174, %17, %175 : vector<1x128xi1>, vector<1x128xi32>
    %cst_53 = arith.constant dense<2147483647> : vector<1xi32>
    %177 = vector.multi_reduction <minsi>, %176, %cst_53 [1] : vector<1x128xi32> to vector<1xi32>
    %178 = vector.shape_cast %177 : vector<1xi32> to vector<1x1xi32>
    %179 = arith.minsi %172, %178 : vector<1x1xi32>
    %c3_i32 = arith.constant 3 : i32
    %180 = vector.broadcast %c3_i32 : i32 to vector<1x128xi32>
    %181 = arith.cmpi eq, %18, %180 : vector<1x128xi32>
    %182 = vector.shape_cast %166 : vector<1x1xf32> to vector<1x1xf32>
    %183 = vector.broadcast %182 : vector<1x1xf32> to vector<1x128xf32>
    %184 = arith.select %181, %183, %138 : vector<1x128xi1>, vector<1x128xf32>
    %c3_i32_54 = arith.constant 3 : i32
    %185 = vector.broadcast %c3_i32_54 : i32 to vector<1x128xi32>
    %186 = arith.cmpi eq, %18, %185 : vector<1x128xi32>
    %187 = vector.shape_cast %179 : vector<1x1xi32> to vector<1x1xi32>
    %188 = vector.broadcast %187 : vector<1x1xi32> to vector<1x128xi32>
    %189 = arith.select %186, %188, %143 : vector<1x128xi1>, vector<1x128xi32>
    %c3_i32_55 = arith.constant 3 : i32
    %190 = vector.broadcast %c3_i32_55 : i32 to vector<1x4xi32>
    %191 = arith.cmpi eq, %19, %190 : vector<1x4xi32>
    %192 = vector.shape_cast %166 : vector<1x1xf32> to vector<1x1xf32>
    %193 = vector.broadcast %192 : vector<1x1xf32> to vector<1x4xf32>
    %194 = arith.select %191, %193, %148 : vector<1x4xi1>, vector<1x4xf32>
    %c3_i32_56 = arith.constant 3 : i32
    %195 = vector.broadcast %c3_i32_56 : i32 to vector<1x4xi32>
    %196 = arith.cmpi eq, %19, %195 : vector<1x4xi32>
    %197 = vector.shape_cast %179 : vector<1x1xi32> to vector<1x1xi32>
    %198 = vector.broadcast %197 : vector<1x1xi32> to vector<1x4xi32>
    %199 = arith.select %196, %198, %153 : vector<1x4xi1>, vector<1x4xi32>
    %c0_57 = arith.constant 0 : index
    %c0_58 = arith.constant 0 : index
    %200 = vector.load %arg8[%c0_57, %c0_58] : memref<1x128xf32, #tpu.memory_space<vmem>>, vector<1x128xf32>
    tpu.vector_store %arg8[%c0_57, %c0_58], %184 {strides = array<i32>} : memref<1x128xf32, #tpu.memory_space<vmem>>, vector<1x128xf32>,
    %c0_59 = arith.constant 0 : index
    %c0_60 = arith.constant 0 : index
    %201 = vector.load %arg9[%c0_59, %c0_60] : memref<1x128xi32, #tpu.memory_space<vmem>>, vector<1x128xi32>
    tpu.vector_store %arg9[%c0_59, %c0_60], %189 {strides = array<i32>} : memref<1x128xi32, #tpu.memory_space<vmem>>, vector<1x128xi32>,
    %c0_i32_61 = arith.constant 0 : i32
    %202 = arith.cmpi eq, %arg0, %c0_i32_61 : i32
    %203 = arith.extui %202 : i1 to i32
    %c0_i32_62 = arith.constant 0 : i32
    %204 = arith.cmpi ne, %203, %c0_i32_62 : i32
    scf.if %204 {
      %c0_63 = arith.constant 0 : index
      %c0_64 = arith.constant 0 : index
      %205 = vector.load %arg6[%c0_63, %c0_64] : memref<1x4xi32, #tpu.memory_space<vmem>>, vector<1x4xi32>
      tpu.vector_store %arg6[%c0_63, %c0_64], %199 {strides = array<i32>} : memref<1x4xi32, #tpu.memory_space<vmem>>, vector<1x4xi32>,
      %c0_65 = arith.constant 0 : index
      %c0_66 = arith.constant 0 : index
      %206 = vector.load %arg9[%c0_65, %c0_66] : memref<1x128xi32, #tpu.memory_space<vmem>>, vector<1x1xi32>
      %207 = vector.extract %206[0, 0] : i32 from vector<1x1xi32>
      %c0_i32_67 = arith.constant 0 : i32
      %c0_i32_68 = arith.constant 0 : i32
      %c0_i32_69 = arith.constant 0 : i32
      %208 = tpu.memref_slice %arg4[%207, %c0_i32_69] : memref<16x128xf32, #tpu.memory_space<any>> -> memref<1x128xf32, #tpu.memory_space<any>>
      %c0_i32_70 = arith.constant 0 : i32
      %c0_i32_71 = arith.constant 0 : i32
      %209 = tpu.memref_slice %arg10[%c0_i32_67, %c0_i32_70, %c0_i32_71] : memref<4x1x128xf32, #tpu.memory_space<vmem>> -> memref<1x1x128xf32, #tpu.memory_space<vmem>>
      %210 = tpu.memref_squeeze %209 : memref<1x1x128xf32, #tpu.memory_space<vmem>> -> memref<1x128xf32, #tpu.memory_space<vmem>>
      %211 = tpu.memref_slice %arg11[%c0_i32_68] : memref<4x!tpu.dma_semaphore, #tpu.memory_space<semaphore_mem>> -> memref<1x!tpu.dma_semaphore, #tpu.memory_space<semaphore_mem>>
      %212 = tpu.memref_squeeze %211 : memref<1x!tpu.dma_semaphore, #tpu.memory_space<semaphore_mem>> -> memref<!tpu.dma_semaphore, #tpu.memory_space<semaphore_mem>>
      tpu.enqueue_dma source(%208 : memref<1x128xf32, #tpu.memory_space<any>>) target(%210 : memref<1x128xf32, #tpu.memory_space<vmem>>) target_semaphore(%212 : memref<!tpu.dma_semaphore, #tpu.memory_space<semaphore_mem>>)
      %c0_72 = arith.constant 0 : index
      %c1 = arith.constant 1 : index
      %213 = vector.load %arg9[%c0_72, %c1] : memref<1x128xi32, #tpu.memory_space<vmem>>, vector<1x1xi32>
      %214 = vector.extract %213[0, 0] : i32 from vector<1x1xi32>
      %c1_i32_73 = arith.constant 1 : i32
      %c1_i32_74 = arith.constant 1 : i32
      %c0_i32_75 = arith.constant 0 : i32
      %215 = tpu.memref_slice %arg4[%214, %c0_i32_75] : memref<16x128xf32, #tpu.memory_space<any>> -> memref<1x128xf32, #tpu.memory_space<any>>
      %c0_i32_76 = arith.constant 0 : i32
      %c0_i32_77 = arith.constant 0 : i32
      %216 = tpu.memref_slice %arg10[%c1_i32_73, %c0_i32_76, %c0_i32_77] : memref<4x1x128xf32, #tpu.memory_space<vmem>> -> memref<1x1x128xf32, #tpu.memory_space<vmem>>
      %217 = tpu.memref_squeeze %216 : memref<1x1x128xf32, #tpu.memory_space<vmem>> -> memref<1x128xf32, #tpu.memory_space<vmem>>
      %218 = tpu.memref_slice %arg11[%c1_i32_74] : memref<4x!tpu.dma_semaphore, #tpu.memory_space<semaphore_mem>> -> memref<1x!tpu.dma_semaphore, #tpu.memory_space<semaphore_mem>>
      %219 = tpu.memref_squeeze %218 : memref<1x!tpu.dma_semaphore, #tpu.memory_space<semaphore_mem>> -> memref<!tpu.dma_semaphore, #tpu.memory_space<semaphore_mem>>
      tpu.enqueue_dma source(%215 : memref<1x128xf32, #tpu.memory_space<any>>) target(%217 : memref<1x128xf32, #tpu.memory_space<vmem>>) target_semaphore(%219 : memref<!tpu.dma_semaphore, #tpu.memory_space<semaphore_mem>>)
      %c0_78 = arith.constant 0 : index
      %c2 = arith.constant 2 : index
      %220 = vector.load %arg9[%c0_78, %c2] : memref<1x128xi32, #tpu.memory_space<vmem>>, vector<1x1xi32>
      %221 = vector.extract %220[0, 0] : i32 from vector<1x1xi32>
      %c2_i32_79 = arith.constant 2 : i32
      %c2_i32_80 = arith.constant 2 : i32
      %c0_i32_81 = arith.constant 0 : i32
      %222 = tpu.memref_slice %arg4[%221, %c0_i32_81] : memref<16x128xf32, #tpu.memory_space<any>> -> memref<1x128xf32, #tpu.memory_space<any>>
      %c0_i32_82 = arith.constant 0 : i32
      %c0_i32_83 = arith.constant 0 : i32
      %223 = tpu.memref_slice %arg10[%c2_i32_79, %c0_i32_82, %c0_i32_83] : memref<4x1x128xf32, #tpu.memory_space<vmem>> -> memref<1x1x128xf32, #tpu.memory_space<vmem>>
      %224 = tpu.memref_squeeze %223 : memref<1x1x128xf32, #tpu.memory_space<vmem>> -> memref<1x128xf32, #tpu.memory_space<vmem>>
      %225 = tpu.memref_slice %arg11[%c2_i32_80] : memref<4x!tpu.dma_semaphore, #tpu.memory_space<semaphore_mem>> -> memref<1x!tpu.dma_semaphore, #tpu.memory_space<semaphore_mem>>
      %226 = tpu.memref_squeeze %225 : memref<1x!tpu.dma_semaphore, #tpu.memory_space<semaphore_mem>> -> memref<!tpu.dma_semaphore, #tpu.memory_space<semaphore_mem>>
      tpu.enqueue_dma source(%222 : memref<1x128xf32, #tpu.memory_space<any>>) target(%224 : memref<1x128xf32, #tpu.memory_space<vmem>>) target_semaphore(%226 : memref<!tpu.dma_semaphore, #tpu.memory_space<semaphore_mem>>)
      %c0_84 = arith.constant 0 : index
      %c3 = arith.constant 3 : index
      %227 = vector.load %arg9[%c0_84, %c3] : memref<1x128xi32, #tpu.memory_space<vmem>>, vector<1x1xi32>
      %228 = vector.extract %227[0, 0] : i32 from vector<1x1xi32>
      %c3_i32_85 = arith.constant 3 : i32
      %c3_i32_86 = arith.constant 3 : i32
      %c0_i32_87 = arith.constant 0 : i32
      %229 = tpu.memref_slice %arg4[%228, %c0_i32_87] : memref<16x128xf32, #tpu.memory_space<any>> -> memref<1x128xf32, #tpu.memory_space<any>>
      %c0_i32_88 = arith.constant 0 : i32
      %c0_i32_89 = arith.constant 0 : i32
      %230 = tpu.memref_slice %arg10[%c3_i32_85, %c0_i32_88, %c0_i32_89] : memref<4x1x128xf32, #tpu.memory_space<vmem>> -> memref<1x1x128xf32, #tpu.memory_space<vmem>>
      %231 = tpu.memref_squeeze %230 : memref<1x1x128xf32, #tpu.memory_space<vmem>> -> memref<1x128xf32, #tpu.memory_space<vmem>>
      %232 = tpu.memref_slice %arg11[%c3_i32_86] : memref<4x!tpu.dma_semaphore, #tpu.memory_space<semaphore_mem>> -> memref<1x!tpu.dma_semaphore, #tpu.memory_space<semaphore_mem>>
      %233 = tpu.memref_squeeze %232 : memref<1x!tpu.dma_semaphore, #tpu.memory_space<semaphore_mem>> -> memref<!tpu.dma_semaphore, #tpu.memory_space<semaphore_mem>>
      tpu.enqueue_dma source(%229 : memref<1x128xf32, #tpu.memory_space<any>>) target(%231 : memref<1x128xf32, #tpu.memory_space<vmem>>) target_semaphore(%233 : memref<!tpu.dma_semaphore, #tpu.memory_space<semaphore_mem>>)
      %cst_90 = arith.constant dense<0xFF800000> : vector<1xf32>
      %234 = vector.multi_reduction <maximumf>, %194, %cst_90 [1] : vector<1x4xf32> to vector<1xf32>
      %235 = vector.shape_cast %234 : vector<1xf32> to vector<1x1xf32>
      %236 = vector.broadcast %235 : vector<1x1xf32> to vector<1x4xf32>
      %237 = arith.subf %194, %236 : vector<1x4xf32>
      %238 = math.exp %237 : vector<1x4xf32>
      %cst_91 = arith.constant dense<0.000000e+00> : vector<1xf32>
      %239 = vector.multi_reduction <add>, %238, %cst_91 [1] : vector<1x4xf32> to vector<1xf32>
      %240 = vector.shape_cast %239 : vector<1xf32> to vector<1x1xf32>
      %241 = vector.broadcast %240 : vector<1x1xf32> to vector<1x4xf32>
      %242 = arith.divf %238, %241 : vector<1x4xf32>
      %c0_i32_92 = arith.constant 0 : i32
      %c0_i32_93 = arith.constant 0 : i32
      %c0_i32_94 = arith.constant 0 : i32
      %243 = tpu.memref_slice %arg4[%207, %c0_i32_94] : memref<16x128xf32, #tpu.memory_space<any>> -> memref<1x128xf32, #tpu.memory_space<any>>
      %c0_i32_95 = arith.constant 0 : i32
      %c0_i32_96 = arith.constant 0 : i32
      %244 = tpu.memref_slice %arg10[%c0_i32_92, %c0_i32_95, %c0_i32_96] : memref<4x1x128xf32, #tpu.memory_space<vmem>> -> memref<1x1x128xf32, #tpu.memory_space<vmem>>
      %245 = tpu.memref_squeeze %244 : memref<1x1x128xf32, #tpu.memory_space<vmem>> -> memref<1x128xf32, #tpu.memory_space<vmem>>
      %246 = tpu.memref_slice %arg11[%c0_i32_93] : memref<4x!tpu.dma_semaphore, #tpu.memory_space<semaphore_mem>> -> memref<1x!tpu.dma_semaphore, #tpu.memory_space<semaphore_mem>>
      %247 = tpu.memref_squeeze %246 : memref<1x!tpu.dma_semaphore, #tpu.memory_space<semaphore_mem>> -> memref<!tpu.dma_semaphore, #tpu.memory_space<semaphore_mem>>
      tpu.wait_dma2 semaphore(%247 : memref<!tpu.dma_semaphore, #tpu.memory_space<semaphore_mem>>) src(%243 : memref<1x128xf32, #tpu.memory_space<any>>) dst(%245 : memref<1x128xf32, #tpu.memory_space<vmem>>)
      %c1_i32_97 = arith.constant 1 : i32
      %c1_i32_98 = arith.constant 1 : i32
      %c0_i32_99 = arith.constant 0 : i32
      %248 = tpu.memref_slice %arg4[%214, %c0_i32_99] : memref<16x128xf32, #tpu.memory_space<any>> -> memref<1x128xf32, #tpu.memory_space<any>>
      %c0_i32_100 = arith.constant 0 : i32
      %c0_i32_101 = arith.constant 0 : i32
      %249 = tpu.memref_slice %arg10[%c1_i32_97, %c0_i32_100, %c0_i32_101] : memref<4x1x128xf32, #tpu.memory_space<vmem>> -> memref<1x1x128xf32, #tpu.memory_space<vmem>>
      %250 = tpu.memref_squeeze %249 : memref<1x1x128xf32, #tpu.memory_space<vmem>> -> memref<1x128xf32, #tpu.memory_space<vmem>>
      %251 = tpu.memref_slice %arg11[%c1_i32_98] : memref<4x!tpu.dma_semaphore, #tpu.memory_space<semaphore_mem>> -> memref<1x!tpu.dma_semaphore, #tpu.memory_space<semaphore_mem>>
      %252 = tpu.memref_squeeze %251 : memref<1x!tpu.dma_semaphore, #tpu.memory_space<semaphore_mem>> -> memref<!tpu.dma_semaphore, #tpu.memory_space<semaphore_mem>>
      tpu.wait_dma2 semaphore(%252 : memref<!tpu.dma_semaphore, #tpu.memory_space<semaphore_mem>>) src(%248 : memref<1x128xf32, #tpu.memory_space<any>>) dst(%250 : memref<1x128xf32, #tpu.memory_space<vmem>>)
      %c2_i32_102 = arith.constant 2 : i32
      %c2_i32_103 = arith.constant 2 : i32
      %c0_i32_104 = arith.constant 0 : i32
      %253 = tpu.memref_slice %arg4[%221, %c0_i32_104] : memref<16x128xf32, #tpu.memory_space<any>> -> memref<1x128xf32, #tpu.memory_space<any>>
      %c0_i32_105 = arith.constant 0 : i32
      %c0_i32_106 = arith.constant 0 : i32
      %254 = tpu.memref_slice %arg10[%c2_i32_102, %c0_i32_105, %c0_i32_106] : memref<4x1x128xf32, #tpu.memory_space<vmem>> -> memref<1x1x128xf32, #tpu.memory_space<vmem>>
      %255 = tpu.memref_squeeze %254 : memref<1x1x128xf32, #tpu.memory_space<vmem>> -> memref<1x128xf32, #tpu.memory_space<vmem>>
      %256 = tpu.memref_slice %arg11[%c2_i32_103] : memref<4x!tpu.dma_semaphore, #tpu.memory_space<semaphore_mem>> -> memref<1x!tpu.dma_semaphore, #tpu.memory_space<semaphore_mem>>
      %257 = tpu.memref_squeeze %256 : memref<1x!tpu.dma_semaphore, #tpu.memory_space<semaphore_mem>> -> memref<!tpu.dma_semaphore, #tpu.memory_space<semaphore_mem>>
      tpu.wait_dma2 semaphore(%257 : memref<!tpu.dma_semaphore, #tpu.memory_space<semaphore_mem>>) src(%253 : memref<1x128xf32, #tpu.memory_space<any>>) dst(%255 : memref<1x128xf32, #tpu.memory_space<vmem>>)
      %c3_i32_107 = arith.constant 3 : i32
      %c3_i32_108 = arith.constant 3 : i32
      %c0_i32_109 = arith.constant 0 : i32
      %258 = tpu.memref_slice %arg4[%228, %c0_i32_109] : memref<16x128xf32, #tpu.memory_space<any>> -> memref<1x128xf32, #tpu.memory_space<any>>
      %c0_i32_110 = arith.constant 0 : i32
      %c0_i32_111 = arith.constant 0 : i32
      %259 = tpu.memref_slice %arg10[%c3_i32_107, %c0_i32_110, %c0_i32_111] : memref<4x1x128xf32, #tpu.memory_space<vmem>> -> memref<1x1x128xf32, #tpu.memory_space<vmem>>
      %260 = tpu.memref_squeeze %259 : memref<1x1x128xf32, #tpu.memory_space<vmem>> -> memref<1x128xf32, #tpu.memory_space<vmem>>
      %261 = tpu.memref_slice %arg11[%c3_i32_108] : memref<4x!tpu.dma_semaphore, #tpu.memory_space<semaphore_mem>> -> memref<1x!tpu.dma_semaphore, #tpu.memory_space<semaphore_mem>>
      %262 = tpu.memref_squeeze %261 : memref<1x!tpu.dma_semaphore, #tpu.memory_space<semaphore_mem>> -> memref<!tpu.dma_semaphore, #tpu.memory_space<semaphore_mem>>
      tpu.wait_dma2 semaphore(%262 : memref<!tpu.dma_semaphore, #tpu.memory_space<semaphore_mem>>) src(%258 : memref<1x128xf32, #tpu.memory_space<any>>) dst(%260 : memref<1x128xf32, #tpu.memory_space<vmem>>)
      %cst_112 = arith.constant 0.000000e+00 : f32
      %263 = vector.broadcast %cst_112 : f32 to vector<1x128xf32>
      %264 = vector.extract_strided_slice %242 {offsets = [0, 0], sizes = [1, 1], strides = [1, 1]} : vector<1x4xf32> to vector<1x1xf32>
      %c0_113 = arith.constant 0 : index
      %c0_114 = arith.constant 0 : index
      %c0_115 = arith.constant 0 : index
      %265 = vector.load %arg10[%c0_113, %c0_114, %c0_115] : memref<4x1x128xf32, #tpu.memory_space<vmem>>, vector<1x1x128xf32>
      %266 = vector.shape_cast %265 : vector<1x1x128xf32> to vector<1x128xf32>
      %267 = vector.broadcast %264 : vector<1x1xf32> to vector<1x128xf32>
      %268 = arith.mulf %267, %266 : vector<1x128xf32>
      %269 = arith.addf %263, %268 : vector<1x128xf32>
      %270 = vector.extract_strided_slice %242 {offsets = [0, 1], sizes = [1, 1], strides = [1, 1]} : vector<1x4xf32> to vector<1x1xf32>
      %c1_116 = arith.constant 1 : index
      %c0_117 = arith.constant 0 : index
      %c0_118 = arith.constant 0 : index
      %271 = vector.load %arg10[%c1_116, %c0_117, %c0_118] : memref<4x1x128xf32, #tpu.memory_space<vmem>>, vector<1x1x128xf32>
      %272 = vector.shape_cast %271 : vector<1x1x128xf32> to vector<1x128xf32>
      %273 = vector.broadcast %270 : vector<1x1xf32> to vector<1x128xf32>
      %274 = arith.mulf %273, %272 : vector<1x128xf32>
      %275 = arith.addf %269, %274 : vector<1x128xf32>
      %276 = vector.extract_strided_slice %242 {offsets = [0, 2], sizes = [1, 1], strides = [1, 1]} : vector<1x4xf32> to vector<1x1xf32>
      %c2_119 = arith.constant 2 : index
      %c0_120 = arith.constant 0 : index
      %c0_121 = arith.constant 0 : index
      %277 = vector.load %arg10[%c2_119, %c0_120, %c0_121] : memref<4x1x128xf32, #tpu.memory_space<vmem>>, vector<1x1x128xf32>
      %278 = vector.shape_cast %277 : vector<1x1x128xf32> to vector<1x128xf32>
      %279 = vector.broadcast %276 : vector<1x1xf32> to vector<1x128xf32>
      %280 = arith.mulf %279, %278 : vector<1x128xf32>
      %281 = arith.addf %275, %280 : vector<1x128xf32>
      %282 = vector.extract_strided_slice %242 {offsets = [0, 3], sizes = [1, 1], strides = [1, 1]} : vector<1x4xf32> to vector<1x1xf32>
      %c3_122 = arith.constant 3 : index
      %c0_123 = arith.constant 0 : index
      %c0_124 = arith.constant 0 : index
      %283 = vector.load %arg10[%c3_122, %c0_123, %c0_124] : memref<4x1x128xf32, #tpu.memory_space<vmem>>, vector<1x1x128xf32>
      %284 = vector.shape_cast %283 : vector<1x1x128xf32> to vector<1x128xf32>
      %285 = vector.broadcast %282 : vector<1x1xf32> to vector<1x128xf32>
      %286 = arith.mulf %285, %284 : vector<1x128xf32>
      %287 = arith.addf %281, %286 : vector<1x128xf32>
      %c0_125 = arith.constant 0 : index
      %c0_126 = arith.constant 0 : index
      %288 = vector.load %arg5[%c0_125, %c0_126] : memref<1x128xf32, #tpu.memory_space<vmem>>, vector<1x128xf32>
      tpu.vector_store %arg5[%c0_125, %c0_126], %287 {strides = array<i32>} : memref<1x128xf32, #tpu.memory_space<vmem>>, vector<1x128xf32>,
    } else {
    }
    return
  }
  func.func @transform_0(%arg0: i32) -> (i32, i32) {
    %c0_i32 = arith.constant 0 : i32
    %c0_i32_0 = arith.constant 0 : i32
    %c0_i32_1 = arith.constant 0 : i32
    return %c0_i32, %c0_i32_0 : i32, i32
  }
  func.func @transform_1(%arg0: i32) -> (i32, i32) {
    %c0_i32 = arith.constant 0 : i32
    %c0_i32_0 = arith.constant 0 : i32
    return %arg0, %c0_i32 : i32, i32
  }
  func.func @transform_2(%arg0: i32) -> (i32, i32) {
    %c0_i32 = arith.constant 0 : i32
    %c0_i32_0 = arith.constant 0 : i32
    %c0_i32_1 = arith.constant 0 : i32
    return %c0_i32, %c0_i32_0 : i32, i32
  }
  func.func @transform_4(%arg0: i32) -> (i32, i32) {
    %c0_i32 = arith.constant 0 : i32
    %c0_i32_0 = arith.constant 0 : i32
    %c0_i32_1 = arith.constant 0 : i32
    return %c0_i32, %c0_i32_0 : i32, i32
  }
  func.func @transform_5(%arg0: i32) -> (i32, i32) {
    %c0_i32 = arith.constant 0 : i32
    %c0_i32_0 = arith.constant 0 : i32
    %c0_i32_1 = arith.constant 0 : i32
    return %c0_i32, %c0_i32_0 : i32, i32
  }
}

</mosaic_0001>

<llo_original>
// kernel: tpu_custom_call.1
$region0: #{tpu_custom_call.1}
  #allocation0 [shape = 'u32[]', space=smem, size = 0x4, offset = 0x4, fixed_abs, tag = 'smem constant byte address 0x4 - core index']
  #allocation1 [shape = 'u32[144,128]{1,0:T(1,128)}', space=vmem, size = 0x12000, scoped, tag = 'internal scratch']
  #allocation2 [shape = 'f32[8,128]{1,0:T(8,128)}', space=vmem, size = 0x1000, scoped, tag = 'scratch operand']
  #allocation3 [shape = 'f32[1,128]{1,0:T(1,128)}', space=vmem, size = 0x200, scoped, tag = 'scratch operand']
  #allocation4 [shape = 's32[1,128]{1,0:T(1,128)}', space=vmem, size = 0x200, scoped, tag = 'scratch operand']
  #allocation5 [shape = 'f32[4,1,128]{2,1,0:T(1,128)}', space=vmem, size = 0x800, scoped, tag = 'scratch operand']
  #allocation6 [shape = 's32[4]{0}', space=sflag, size = 0x10, scoped, tag = 'scratch operand']
  #allocation15 [shape = 's32[]', space=sflag, size = 0x4, offset = 0, fixed_abs, tag = 'sflag constant byte address 0x0 - dummy sync flag']
  #allocation16 [shape = 's32[]', space=sflag, size = 0x4, offset = 0, fixed_abs, tag = 'sflag constant byte address 0x0 - dummy sync flag']
  #allocation17 [shape = 'u32[]', space=smem, size = 0x4, offset = 0x44, fixed_abs, tag = 'smem constant byte address 0x44 - assertion arg 0']
  #allocation18 [shape = 'u32[]', space=smem, size = 0x4, offset = 0x48, fixed_abs, tag = 'smem constant byte address 0x48 - assertion arg 1']
  #allocation19 [shape = 's32[]', space=sflag, size = 0x4, offset = 0, fixed_abs, tag = 'sflag constant byte address 0x0 - dummy sync flag']
  #allocation20 [shape = 's32[]', space=sflag, size = 0x4, offset = 0, fixed_abs, tag = 'sflag constant byte address 0x0 - dummy sync flag']
  #allocation21 [shape = 's32[]', space=sflag, size = 0x4, offset = 0, fixed_abs, tag = 'sflag constant byte address 0x0 - dummy sync flag']
  #allocation22 [shape = 's32[]', space=sflag, size = 0x4, offset = 0, fixed_abs, tag = 'sflag constant byte address 0x0 - dummy sync flag']
  #allocation23 [shape = 's32[]', space=sflag, size = 0x4, offset = 0, fixed_abs, tag = 'sflag constant byte address 0x0 - dummy sync flag']
  #allocation24 [shape = 's32[]', space=sflag, size = 0x4, offset = 0, fixed_abs, tag = 'sflag constant byte address 0x0 - dummy sync flag']
  %s0 = inlined_call_operand.hbm [shape: f32[8,128], index: 0, kind: input, shape index: {}]
  %s1 = inlined_call_operand.hbm [shape: f32[128,128], index: 1, kind: input, shape index: {}]
  %s2 = inlined_call_operand.vmem [shape: f32[1,128], index: 2, kind: input, shape index: {}]
  %s3 = inlined_call_operand.hbm [shape: f32[16,128], index: 3, kind: input, shape index: {}]
  %s4 = inlined_call_operand.hbm [shape: f32[1,128], index: 4, kind: output, shape index: {0}]
  %s5 = inlined_call_operand.hbm [shape: s32[1,4], index: 5, kind: output, shape index: {1}]
  %6 = xla_tuple %s4, %s5
  %s7 = sld [smem:[#allocation0]]
  $region62: #{tpu_custom_call.1} parent=0
    _
  %s9 = ssub.s32 1, %s7
  %s10 = scalar_select 0, %s9, %s7
  $region1: #{tpu_custom_call.1} parent=0
    #allocation7 [shape = 'u8[4096]{0}', space=vmem, size = 0x1000, scoped, tag = 'input window, operand 0, single buffered']
    #allocation8 [shape = 's32[1]{0}', space=sflag, size = 0x4, scoped, tag = 'scoped memory for tpu_custom_call.1']
    #allocation9 [shape = 's32[1]{0}', space=sflag, size = 0x4, scoped, tag = 'scoped memory for tpu_custom_call.1']
    #allocation10 [shape = 'u8[65536]{0}', space=vmem, size = 0x10000, scoped, tag = 'input window, operand 1, single buffered']
    #allocation11 [shape = 's32[1]{0}', space=sflag, size = 0x4, scoped, tag = 'scoped memory for tpu_custom_call.1']
    #allocation12 [shape = 'u8[512]{0}', space=vmem, size = 0x400, scoped, tag = 'output window, operand 0, single buffered']
    #allocation13 [shape = 'u8[512]{0}', space=vmem, size = 0x400, scoped, tag = 'output window, operand 1, single buffered']
    #allocation14 [shape = 's32[1]{0}', space=sflag, size = 0x4, scoped, tag = 'scoped memory for tpu_custom_call.1']
    %11 = vsyncpa [#allocation8], 0
    %12 = vsyncpa [#allocation11], 0
    %13 = vsyncpa [#allocation9], 0
    %14 = vsyncpa [#allocation14], 0
    // Predicated region
    $region2: #{tpu_custom_call.1} parent=1 // pred_check
      _
    $region3: #{tpu_custom_call.1} parent=1 // pred_check_branch
      %16 = sbr.rel (0) target = $region5
    $region4: #{tpu_custom_call.1} parent=1 // pred_region
      %s18 = ssub.s32 128, 128
      %19 = vsyncadd [#allocation8], %s18
      %s21 = sshll.u32 [#allocation7], 4
      %s22 = int_to_ptr.vmem [resolvable:$true] %s21
      %24 = dma.hbm_to_vmem [thread:$0]  %s0, 128, %s22, [#allocation8]
    $region5: #{tpu_custom_call.1} parent=1 // pred_fallthru
      _
    // Predicated region
    $region6: #{tpu_custom_call.1} parent=1 // pred_check
      _
    $region7: #{tpu_custom_call.1} parent=1 // pred_check_branch
      %26 = sbr.rel (0) target = $region9
    $region8: #{tpu_custom_call.1} parent=1 // pred_region
      %s28 = ssub.s32 2048, 2048
      %29 = vsyncadd [#allocation11], %s28
      %s30 = sshll.u32 [#allocation10], 4
      %s31 = int_to_ptr.vmem [resolvable:$true] %s30
      %36 = dma.hbm_to_vmem [thread:$0]  %s1, 2048, %s31, [#allocation11], 128, 128, 8
    $region9: #{tpu_custom_call.1} parent=1 // pred_fallthru
      _
    // Predicated region
    $region10: #{tpu_custom_call.1} parent=1 // pred_check
      _
    $region11: #{tpu_custom_call.1} parent=1 // pred_check_branch
      %38 = sbr.rel (0) target = $region13
    $region12: #{tpu_custom_call.1} parent=1 // pred_region
      _
    $region13: #{tpu_custom_call.1} parent=1 // pred_fallthru
      _
    // Predicated region
    $region14: #{tpu_custom_call.1} parent=1 // pred_check
      _
    $region15: #{tpu_custom_call.1} parent=1 // pred_check_branch
      %40 = sbr.rel (0) target = $region17
    $region16: #{tpu_custom_call.1} parent=1 // pred_region
      %41 = dma.done [#allocation8], 128
    $region17: #{tpu_custom_call.1} parent=1 // pred_fallthru
      _
    // Predicated region
    $region18: #{tpu_custom_call.1} parent=1 // pred_check
      _
    $region19: #{tpu_custom_call.1} parent=1 // pred_check_branch
      %43 = sbr.rel (0) target = $region21
    $region20: #{tpu_custom_call.1} parent=1 // pred_region
      %44 = dma.done [#allocation11], 2048
    $region21: #{tpu_custom_call.1} parent=1 // pred_fallthru
      _
    %p45 = scmp.eq.s32.totalorder 0, 0
    // Predicated region
    $region22: #{tpu_custom_call.1} parent=1 // pred_check
      %p46 = pneg %p45
    $region23: #{tpu_custom_call.1} parent=1 // pred_check_branch
      %48 = sbr.rel (%p46) target = $region25
    $region24: #{tpu_custom_call.1} parent=1 // pred_region
      %v49 = vld [vmem:[#allocation7] sm:$0xff]
      %v50 = vld [vmem:[%s2] sm:$0x1]
      %v52 = vlaneseq
      %v53 = vshrl.u32 %v52, 7
      %v54 = vsub.s32 0, %v53
      %v55 = vrot.slane %v50, %v54
      %v57 = vmul.f32 %v49, %v55
      %58 = vst [vmem:[#allocation2] sm:$0xff] %v57
      %59 = vst [vmem:[#allocation3] sm:$0x1] -inf
      %60 = vst [vmem:[#allocation4] sm:$0x1] 128
    $region25: #{tpu_custom_call.1} parent=1 // pred_fallthru
      _
    %v61 = vld [vmem:[#allocation2] sm:$0xff]
    %v62 = vld [vmem:[#allocation10] sm:$0xff]
    %v63 = vld [vmem:[#allocation10 + $0x8] sm:$0xff]
    %v64 = vld [vmem:[#allocation10 + $0x10] sm:$0xff]
    %v65 = vld [vmem:[#allocation10 + $0x18] sm:$0xff]
    %v66 = vld [vmem:[#allocation10 + $0x20] sm:$0xff]
    %v67 = vld [vmem:[#allocation10 + $0x28] sm:$0xff]
    %v68 = vld [vmem:[#allocation10 + $0x30] sm:$0xff]
    %v69 = vld [vmem:[#allocation10 + $0x38] sm:$0xff]
    %v70 = vld [vmem:[#allocation10 + $0x40] sm:$0xff]
    %v71 = vld [vmem:[#allocation10 + $0x48] sm:$0xff]
    %v72 = vld [vmem:[#allocation10 + $0x50] sm:$0xff]
    %v73 = vld [vmem:[#allocation10 + $0x58] sm:$0xff]
    %v74 = vld [vmem:[#allocation10 + $0x60] sm:$0xff]
    %v75 = vld [vmem:[#allocation10 + $0x68] sm:$0xff]
    %v76 = vld [vmem:[#allocation10 + $0x70] sm:$0xff]
    %v77 = vld [vmem:[#allocation10 + $0x78] sm:$0xff]
    %78 = vmatprep.subr.mxu0 0.0
    %79 = vmatpush1.xpose.msra.mxu0 %v62
    %80 = vmatprep.subr.mxu0 0.0
    %81 = vmatpush1.xpose.msra.mxu0 %v63
    %82 = vmatprep.subr.mxu0 0.0
    %83 = vmatpush1.xpose.msra.mxu0 %v64
    %84 = vmatprep.subr.mxu0 0.0
    %85 = vmatpush1.xpose.msra.mxu0 %v65
    %86 = vmatprep.subr.mxu0 0.0
    %87 = vmatpush1.xpose.msra.mxu0 %v66
    %88 = vmatprep.subr.mxu0 0.0
    %89 = vmatpush1.xpose.msra.mxu0 %v67
    %90 = vmatprep.subr.mxu0 0.0
    %91 = vmatpush1.xpose.msra.mxu0 %v68
    %92 = vmatprep.subr.mxu0 0.0
    %93 = vmatpush1.xpose.msra.mxu0 %v69
    %94 = vmatprep.subr.mxu0 0.0
    %95 = vmatpush1.xpose.msra.mxu0 %v70
    %96 = vmatprep.subr.mxu0 0.0
    %97 = vmatpush1.xpose.msra.mxu0 %v71
    %98 = vmatprep.subr.mxu0 0.0
    %99 = vmatpush1.xpose.msra.mxu0 %v72
    %100 = vmatprep.subr.mxu0 0.0
    %101 = vmatpush1.xpose.msra.mxu0 %v73
    %102 = vmatprep.subr.mxu0 0.0
    %103 = vmatpush1.xpose.msra.mxu0 %v74
    %104 = vmatprep.subr.mxu0 0.0
    %105 = vmatpush1.xpose.msra.mxu0 %v75
    %106 = vmatprep.subr.mxu0 0.0
    %107 = vmatpush1.xpose.msra.mxu0 %v76
    %108 = vmatprep.subr.mxu0 0.0
    %109 = vmatpush1.xpose.msra.mxu0 %v77
    %110 = vmatprep.subr.mxu0 0.0
    %111 = vmatpush1.xpose.msra.mxu0 0.0
    %112 = vmatprep.subr.mxu0 0.0
    %113 = vmatpush1.xpose.msra.mxu0 0.0
    %114 = vmatprep.subr.mxu0 0.0
    %115 = vmatpush1.xpose.msra.mxu0 0.0
    %116 = vmatprep.subr.mxu0 0.0
    %117 = vmatpush1.xpose.msra.mxu0 0.0
    %118 = vmatprep.subr.mxu0 0.0
    %119 = vmatpush1.xpose.msra.mxu0 0.0
    %120 = vmatprep.subr.mxu0 0.0
    %121 = vmatpush1.xpose.msra.mxu0 0.0
    %122 = vmatprep.subr.mxu0 0.0
    %123 = vmatpush1.xpose.msra.mxu0 0.0
    %124 = vmatprep.subr.mxu0 0.0
    %125 = vmatpush1.xpose.msra.mxu0 0.0
    %126 = vmatprep.subr.mxu0 0.0
    %127 = vmatpush1.xpose.msra.mxu0 0.0
    %128 = vmatprep.subr.mxu0 0.0
    %129 = vmatpush1.xpose.msra.mxu0 0.0
    %130 = vmatprep.subr.mxu0 0.0
    %131 = vmatpush1.xpose.msra.mxu0 0.0
    %132 = vmatprep.subr.mxu0 0.0
    %133 = vmatpush1.xpose.msra.mxu0 0.0
    %134 = vmatprep.subr.mxu0 0.0
    %135 = vmatpush1.xpose.msra.mxu0 0.0
    %136 = vmatprep.subr.mxu0 0.0
    %137 = vmatpush1.xpose.msra.mxu0 0.0
    %138 = vmatprep.subr.mxu0 0.0
    %139 = vmatpush1.xpose.msra.mxu0 0.0
    %140 = vmatprep.subr.mxu0 0.0
    %141 = vmatpush1.xpose.msra.mxu0 0.0
    %142 = vmatprep.mubr.f32.mxu0 0.0
    %143 = vmatmul.mubr.f32.gmra.mrb[0].mxu0 %v61
    %v144 = vpop.f32.mrb[0].mxu0
    %v145 = vadd.f32 0.0, %v144
    %v146 = vpop.f32.mrb[0].mxu0
    %147 = vdwg.mxu0
    %v148 = vrot.slane %v145, 4
    %v149 = vmax.f32 %v145, %v148
    %v150 = vrot.slane %v149, 2
    %v151 = vmax.f32 %v149, %v150
    %v152 = vrot.slane %v151, 1
    %v153 = vmax.f32 %v151, %v152
    %s154 = smul.u32 0, 128
    %v155 = vlaneseq
    %v156 = vand.u32 %v155, 127
    %v157 = vstv %s154
    %v158 = vadd.s32 %v157, %v156
    %vm159 = vcmp.lt.s32.totalorder %v158, 16
    %v160 = vsel %vm159, %v153, -inf
    %v161 = vld [vmem:[#allocation3] sm:$0x1]
    %v162 = vld [vmem:[#allocation4] sm:$0x1]
    %163 = vmax.xlane.f32.xlu0 %v160
    %v164 = vpop.xlane.xlu0 %163
    %vm165 = vcmask 1040384
    %v166 = vsel %vm165, %v161, -inf
    %167 = vmax.xlane.f32.xlu0 %v166
    %v168 = vpop.xlane.xlu0 %167
    %v169 = vmax.f32 %v164, %v168
    %vm170 = vcmp.eq.f32.partialorder %v160, %v169
    %v171 = vsel %vm170, %v158, 128
    %v172 = vsel %vm165, %v171, 2147483647
    %v173 = vand.u32 %v172, 65535
    %v174 = vshra.s32 %v172, 16
    %v175 = vcvt.s32.f32 %v173
    %v176 = vcvt.s32.f32 %v174
    %177 = vmin.xlane.f32.xlu0 %v176
    %v178 = vpop.xlane.xlu0 %177
    %vm179 = vcmp.eq.f32.partialorder %v176, %v178
    %v180 = vsel %vm179, %v175, inf
    %181 = vmin.xlane.f32.xlu0 %v180
    %v182 = vpop.xlane.xlu0 %181
    %v183 = vcvt.f32.s32 %v182
    %v184 = vcvt.f32.s32 %v178
    %v185 = vshll.u32 %v184, 16
    %v186 = vadd.s32 %v185, %v183
    %vm187 = vcmp.eq.f32.partialorder %v161, %v169
    %v188 = vsel %vm187, %v162, 128
    %v189 = vsel %vm165, %v188, 2147483647
    %v190 = vand.u32 %v189, 65535
    %v191 = vshra.s32 %v189, 16
    %v192 = vcvt.s32.f32 %v190
    %v193 = vcvt.s32.f32 %v191
    %194 = vmin.xlane.f32.xlu0 %v193
    %v195 = vpop.xlane.xlu0 %194
    %vm196 = vcmp.eq.f32.partialorder %v193, %v195
    %v197 = vsel %vm196, %v192, inf
    %198 = vmin.xlane.f32.xlu0 %v197
    %v199 = vpop.xlane.xlu0 %198
    %v200 = vcvt.f32.s32 %v199
    %v201 = vcvt.f32.s32 %v195
    %v202 = vshll.u32 %v201, 16
    %v203 = vadd.s32 %v202, %v200
    %vm204 = vcmp.lt.s32.totalorder %v186, %v203
    %v205 = vsel %vm204, %v186, %v203
    %vm206 = vcmp.eq.s32.totalorder %v156, 0
    %v207 = vsel %vm206, %v169, -inf
    %v208 = vsel %vm206, %v205, 128
    %v209 = vsel %vm206, %v169, 0.0
    %v210 = vsel %vm206, %v205, 0
    %vm211 = vcmp.eq.s32.totalorder %v158, %v205
    %v212 = vsel %vm211, -inf, %v160
    %vm213 = vcmp.eq.s32.totalorder %v162, %v205
    %v214 = vsel %vm213, -inf, %v161
    %v215 = vsel %vm165, %v212, -inf
    %216 = vmax.xlane.f32.xlu0 %v215
    %v217 = vpop.xlane.xlu0 %216
    %v218 = vsel %vm165, %v214, -inf
    %219 = vmax.xlane.f32.xlu0 %v218
    %v220 = vpop.xlane.xlu0 %219
    %v221 = vmax.f32 %v217, %v220
    %vm222 = vcmp.eq.f32.partialorder %v212, %v221
    %v223 = vsel %vm222, %v158, 128
    %v224 = vsel %vm165, %v223, 2147483647
    %v225 = vand.u32 %v224, 65535
    %v226 = vshra.s32 %v224, 16
    %v227 = vcvt.s32.f32 %v225
    %v228 = vcvt.s32.f32 %v226
    %229 = vmin.xlane.f32.xlu0 %v228
    %v230 = vpop.xlane.xlu0 %229
    %vm231 = vcmp.eq.f32.partialorder %v228, %v230
    %v232 = vsel %vm231, %v227, inf
    %233 = vmin.xlane.f32.xlu0 %v232
    %v234 = vpop.xlane.xlu0 %233
    %v235 = vcvt.f32.s32 %v234
    %v236 = vcvt.f32.s32 %v230
    %v237 = vshll.u32 %v236, 16
    %v238 = vadd.s32 %v237, %v235
    %vm239 = vcmp.eq.f32.partialorder %v214, %v221
    %v240 = vsel %vm239, %v162, 128
    %v241 = vsel %vm165, %v240, 2147483647
    %v242 = vand.u32 %v241, 65535
    %v243 = vshra.s32 %v241, 16
    %v244 = vcvt.s32.f32 %v242
    %v245 = vcvt.s32.f32 %v243
    %246 = vmin.xlane.f32.xlu0 %v245
    %v247 = vpop.xlane.xlu0 %246
    %vm248 = vcmp.eq.f32.partialorder %v245, %v247
    %v249 = vsel %vm248, %v244, inf
    %250 = vmin.xlane.f32.xlu0 %v249
    %v251 = vpop.xlane.xlu0 %250
    %v252 = vcvt.f32.s32 %v251
    %v253 = vcvt.f32.s32 %v247
    %v254 = vshll.u32 %v253, 16
    %v255 = vadd.s32 %v254, %v252
    %vm256 = vcmp.lt.s32.totalorder %v238, %v255
    %v257 = vsel %vm256, %v238, %v255
    %vm258 = vcmp.eq.s32.totalorder %v156, 1
    %v259 = vsel %vm258, %v221, %v207
    %v260 = vsel %vm258, %v257, %v208
    %v261 = vsel %vm258, %v221, %v209
    %v262 = vsel %vm258, %v257, %v210
    %vm263 = vcmp.eq.s32.totalorder %v158, %v257
    %v264 = vsel %vm263, -inf, %v212
    %vm265 = vcmp.eq.s32.totalorder %v162, %v257
    %v266 = vsel %vm265, -inf, %v214
    %v267 = vsel %vm165, %v264, -inf
    %268 = vmax.xlane.f32.xlu0 %v267
    %v269 = vpop.xlane.xlu0 %268
    %v270 = vsel %vm165, %v266, -inf
    %271 = vmax.xlane.f32.xlu0 %v270
    %v272 = vpop.xlane.xlu0 %271
    %v273 = vmax.f32 %v269, %v272
    %vm274 = vcmp.eq.f32.partialorder %v264, %v273
    %v275 = vsel %vm274, %v158, 128
    %v276 = vsel %vm165, %v275, 2147483647
    %v277 = vand.u32 %v276, 65535
    %v278 = vshra.s32 %v276, 16
    %v279 = vcvt.s32.f32 %v277
    %v280 = vcvt.s32.f32 %v278
    %281 = vmin.xlane.f32.xlu0 %v280
    %v282 = vpop.xlane.xlu0 %281
    %vm283 = vcmp.eq.f32.partialorder %v280, %v282
    %v284 = vsel %vm283, %v279, inf
    %285 = vmin.xlane.f32.xlu0 %v284
    %v286 = vpop.xlane.xlu0 %285
    %v287 = vcvt.f32.s32 %v286
    %v288 = vcvt.f32.s32 %v282
    %v289 = vshll.u32 %v288, 16
    %v290 = vadd.s32 %v289, %v287
    %vm291 = vcmp.eq.f32.partialorder %v266, %v273
    %v292 = vsel %vm291, %v162, 128
    %v293 = vsel %vm165, %v292, 2147483647
    %v294 = vand.u32 %v293, 65535
    %v295 = vshra.s32 %v293, 16
    %v296 = vcvt.s32.f32 %v294
    %v297 = vcvt.s32.f32 %v295
    %298 = vmin.xlane.f32.xlu0 %v297
    %v299 = vpop.xlane.xlu0 %298
    %vm300 = vcmp.eq.f32.partialorder %v297, %v299
    %v301 = vsel %vm300, %v296, inf
    %302 = vmin.xlane.f32.xlu0 %v301
    %v303 = vpop.xlane.xlu0 %302
    %v304 = vcvt.f32.s32 %v303
    %v305 = vcvt.f32.s32 %v299
    %v306 = vshll.u32 %v305, 16
    %v307 = vadd.s32 %v306, %v304
    %vm308 = vcmp.lt.s32.totalorder %v290, %v307
    %v309 = vsel %vm308, %v290, %v307
    %vm310 = vcmp.eq.s32.totalorder %v156, 2
    %v311 = vsel %vm310, %v273, %v259
    %v312 = vsel %vm310, %v309, %v260
    %v313 = vsel %vm310, %v273, %v261
    %v314 = vsel %vm310, %v309, %v262
    %vm315 = vcmp.eq.s32.totalorder %v158, %v309
    %v316 = vsel %vm315, -inf, %v264
    %vm317 = vcmp.eq.s32.totalorder %v162, %v309
    %v318 = vsel %vm317, -inf, %v266
    %v319 = vsel %vm165, %v316, -inf
    %320 = vmax.xlane.f32.xlu0 %v319
    %v321 = vpop.xlane.xlu0 %320
    %v322 = vsel %vm165, %v318, -inf
    %323 = vmax.xlane.f32.xlu0 %v322
    %v324 = vpop.xlane.xlu0 %323
    %v325 = vmax.f32 %v321, %v324
    %vm326 = vcmp.eq.f32.partialorder %v316, %v325
    %v327 = vsel %vm326, %v158, 128
    %v328 = vsel %vm165, %v327, 2147483647
    %v329 = vand.u32 %v328, 65535
    %v330 = vshra.s32 %v328, 16
    %v331 = vcvt.s32.f32 %v329
    %v332 = vcvt.s32.f32 %v330
    %333 = vmin.xlane.f32.xlu0 %v332
    %v334 = vpop.xlane.xlu0 %333
    %vm335 = vcmp.eq.f32.partialorder %v332, %v334
    %v336 = vsel %vm335, %v331, inf
    %337 = vmin.xlane.f32.xlu0 %v336
    %v338 = vpop.xlane.xlu0 %337
    %v339 = vcvt.f32.s32 %v338
    %v340 = vcvt.f32.s32 %v334
    %v341 = vshll.u32 %v340, 16
    %v342 = vadd.s32 %v341, %v339
    %vm343 = vcmp.eq.f32.partialorder %v318, %v325
    %v344 = vsel %vm343, %v162, 128
    %v345 = vsel %vm165, %v344, 2147483647
    %v346 = vand.u32 %v345, 65535
    %v347 = vshra.s32 %v345, 16
    %v348 = vcvt.s32.f32 %v346
    %v349 = vcvt.s32.f32 %v347
    %350 = vmin.xlane.f32.xlu0 %v349
    %v351 = vpop.xlane.xlu0 %350
    %vm352 = vcmp.eq.f32.partialorder %v349, %v351
    %v353 = vsel %vm352, %v348, inf
    %354 = vmin.xlane.f32.xlu0 %v353
    %v355 = vpop.xlane.xlu0 %354
    %v356 = vcvt.f32.s32 %v355
    %v357 = vcvt.f32.s32 %v351
    %v358 = vshll.u32 %v357, 16
    %v359 = vadd.s32 %v358, %v356
    %vm360 = vcmp.lt.s32.totalorder %v342, %v359
    %v361 = vsel %vm360, %v342, %v359
    %vm362 = vcmp.eq.s32.totalorder %v156, 3
    %v363 = vsel %vm362, %v325, %v311
    %v364 = vsel %vm362, %v361, %v312
    %v365 = vsel %vm362, %v325, %v313
    %v366 = vsel %vm362, %v361, %v314
    %367 = vst [vmem:[#allocation3] sm:$0x1] %v363
    %368 = vst [vmem:[#allocation4] sm:$0x1] %v364
    // Predicated region
    $region26: #{tpu_custom_call.1} parent=1 // pred_check
      %p369 = pneg %p45
    $region27: #{tpu_custom_call.1} parent=1 // pred_check_branch
      %371 = sbr.rel (%p369) target = $region29
    $region28: #{tpu_custom_call.1} parent=1 // pred_region
      %vm372 = vcmask 24576
      %373 = vst.msk [vmem:[#allocation13] sm:$0x1] %vm372, %v366
      %v374 = vld [vmem:[#allocation4] sm:$0x1]
      %s375 = vtos %v374
      %s376 = smul.addr %s375, 16
      %s377 = scalar_lea.hbm %s3, %s376
      // Predicated region
      $region30: #{tpu_custom_call.1} parent=28 // pred_check
        _
      $region31: #{tpu_custom_call.1} parent=28 // pred_check_branch
        %379 = sbr.rel target = $region33
      $region32: #{tpu_custom_call.1} parent=28 // pred_region
        %380 = sst [smem:[#allocation17]] [#allocation16]
        %381 = sst [smem:[#allocation18]] [#allocation15]
      $region33: #{tpu_custom_call.1} parent=28 // pred_fallthru
        _
      %383 = shalt.err (0)
      %s385 = sshll.u32 [#allocation5], 4
      %s386 = int_to_ptr.vmem [resolvable:$true] %s385
      %388 = dma.hbm_to_vmem [thread:$0]  %s377, 16, %s386, [#allocation6]
      %v389 = vld [vmem:[#allocation4] sm:$0x1]
      %390 = vrot.lane.b32.xlu0 %v389, 127
      %v391 = vpop.permute.xlu0 %390
      %s392 = vtos %v391
      %s393 = smul.addr %s392, 16
      %s394 = scalar_lea.hbm %s3, %s393
      %s395 = scalar_lea.vmem [#allocation5], 1
      %s396 = scalar_lea.sflag [#allocation6], 1
      // Predicated region
      $region34: #{tpu_custom_call.1} parent=28 // pred_check
        _
      $region35: #{tpu_custom_call.1} parent=28 // pred_check_branch
        %398 = sbr.rel target = $region37
      $region36: #{tpu_custom_call.1} parent=28 // pred_region
        %399 = sst [smem:[#allocation17]] [#allocation20]
        %400 = sst [smem:[#allocation18]] [#allocation19]
      $region37: #{tpu_custom_call.1} parent=28 // pred_fallthru
        _
      %402 = shalt.err (0)
      %s404 = sshll.u32 %s395, 4
      %s405 = int_to_ptr.vmem [resolvable:$true] %s404
      %407 = dma.hbm_to_vmem [thread:$0]  %s394, 16, %s405, %s396
      %v408 = vld [vmem:[#allocation4] sm:$0x1]
      %409 = vrot.lane.b32.xlu0 %v408, 126
      %v410 = vpop.permute.xlu0 %409
      %s411 = vtos %v410
      %s412 = smul.addr %s411, 16
      %s413 = scalar_lea.hbm %s3, %s412
      %s414 = scalar_lea.vmem [#allocation5], 2
      %s415 = scalar_lea.sflag [#allocation6], 2
      // Predicated region
      $region38: #{tpu_custom_call.1} parent=28 // pred_check
        _
      $region39: #{tpu_custom_call.1} parent=28 // pred_check_branch
        %417 = sbr.rel target = $region41
      $region40: #{tpu_custom_call.1} parent=28 // pred_region
        %418 = sst [smem:[#allocation17]] [#allocation22]
        %419 = sst [smem:[#allocation18]] [#allocation21]
      $region41: #{tpu_custom_call.1} parent=28 // pred_fallthru
        _
      %421 = shalt.err (0)
      %s423 = sshll.u32 %s414, 4
      %s424 = int_to_ptr.vmem [resolvable:$true] %s423
      %426 = dma.hbm_to_vmem [thread:$0]  %s413, 16, %s424, %s415
      %v427 = vld [vmem:[#allocation4] sm:$0x1]
      %428 = vrot.lane.b32.xlu0 %v427, 125
      %v429 = vpop.permute.xlu0 %428
      %s430 = vtos %v429
      %s431 = smul.addr %s430, 16
      %s432 = scalar_lea.hbm %s3, %s431
      %s433 = scalar_lea.vmem [#allocation5], 3
      %s434 = scalar_lea.sflag [#allocation6], 3
      // Predicated region
      $region42: #{tpu_custom_call.1} parent=28 // pred_check
        _
      $region43: #{tpu_custom_call.1} parent=28 // pred_check_branch
        %436 = sbr.rel target = $region45
      $region44: #{tpu_custom_call.1} parent=28 // pred_region
        %437 = sst [smem:[#allocation17]] [#allocation24]
        %438 = sst [smem:[#allocation18]] [#allocation23]
      $region45: #{tpu_custom_call.1} parent=28 // pred_fallthru
        _
      %440 = shalt.err (0)
      %s442 = sshll.u32 %s433, 4
      %s443 = int_to_ptr.vmem [resolvable:$true] %s442
      %445 = dma.hbm_to_vmem [thread:$0]  %s432, 16, %s443, %s434
      %v446 = vsel %vm372, %v365, -inf
      %447 = vmax.xlane.f32.xlu0 %v446
      %v448 = vpop.xlane.xlu0 %447
      %v449 = vsub.f32 %v365, %v448
      %v450 = vmul.f32 %v449, 1.442695
      %v451 = vpow.pop %v450
      %v452 = vsel %vm372, %v451, 0.0
      %453 = vadd.xlane.f32.xlu0 %v452
      %v454 = vpop.xlane.xlu0 %453
      %v455 = vrcp.pop %v454
      %v456 = vmul.f32 %v451, %v455
      %s457 = smul.u32 1, 1
      %s458 = sshll.u32 %s457, 4
      %459 = dma.done [#allocation6], %s458
      %s460 = sshll.u32 %s457, 4
      %461 = dma.done %s396, %s460
      %s462 = sshll.u32 %s457, 4
      %463 = dma.done %s415, %s462
      %s464 = sshll.u32 %s457, 4
      %465 = dma.done %s434, %s464
      %v466 = vld [vmem:[#allocation5] sm:$0x1]
      %468 = vset.pattern.permute.xlu0 0
      %469 = vperm.xlu0 %468, %v456
      %v470 = vpop.permute.xlu0 %469
      %v472 = vmul.f32 %v470, %v466
      %v473 = vadd.f32 %v472, 0.0
      %v474 = vld [vmem:[%s395] sm:$0x1]
      %475 = vset.pattern.permute.xlu0 1
      %476 = vperm.xlu0 %475, %v456
      %v477 = vpop.permute.xlu0 %476
      %v479 = vmul.f32 %v477, %v474
      %v480 = vadd.f32 %v473, %v479
      %v481 = vld [vmem:[%s414] sm:$0x1]
      %482 = vset.pattern.permute.xlu0 2
      %483 = vperm.xlu0 %482, %v456
      %v484 = vpop.permute.xlu0 %483
      %v486 = vmul.f32 %v484, %v481
      %v487 = vadd.f32 %v480, %v486
      %v488 = vld [vmem:[%s433] sm:$0x1]
      %489 = vset.pattern.permute.xlu0 3
      %490 = vperm.xlu0 %489, %v456
      %v491 = vpop.permute.xlu0 %490
      %v493 = vmul.f32 %v491, %v488
      %v494 = vadd.f32 %v487, %v493
      %495 = vst [vmem:[#allocation12] sm:$0x1] %v494
    $region29: #{tpu_custom_call.1} parent=1 // pred_fallthru
      _
    // Predicated region
    $region46: #{tpu_custom_call.1} parent=1 // pred_check
      _
    $region47: #{tpu_custom_call.1} parent=1 // pred_check_branch
      %497 = sbr.rel (0) target = $region49
    $region48: #{tpu_custom_call.1} parent=1 // pred_region
      %s499 = ssub.s32 16, 16
      %500 = vsyncadd [#allocation9], %s499
      %s502 = sshll.u32 [#allocation12], 4
      %s503 = int_to_ptr.vmem [resolvable:$true] %s502
      %505 = dma.vmem_to_hbm [thread:$0]  %s503, 16, %s4, [#allocation9]
    $region49: #{tpu_custom_call.1} parent=1 // pred_fallthru
      _
    // Predicated region
    $region50: #{tpu_custom_call.1} parent=1 // pred_check
      _
    $region51: #{tpu_custom_call.1} parent=1 // pred_check_branch
      %507 = sbr.rel (0) target = $region53
    $region52: #{tpu_custom_call.1} parent=1 // pred_region
      %s509 = ssub.s32 16, 16
      %510 = vsyncadd [#allocation14], %s509
      %s512 = sshll.u32 [#allocation13], 4
      %s513 = int_to_ptr.vmem [resolvable:$true] %s512
      %515 = dma.vmem_to_hbm [thread:$0]  %s513, 16, %s5, [#allocation14]
    $region53: #{tpu_custom_call.1} parent=1 // pred_fallthru
      _
    // Predicated region
    $region54: #{tpu_custom_call.1} parent=1 // pred_check
      _
    $region55: #{tpu_custom_call.1} parent=1 // pred_check_branch
      %517 = sbr.rel (0) target = $region57
    $region56: #{tpu_custom_call.1} parent=1 // pred_region
      %518 = dma.done [#allocation9], 16
    $region57: #{tpu_custom_call.1} parent=1 // pred_fallthru
      _
    // Predicated region
    $region58: #{tpu_custom_call.1} parent=1 // pred_check
      _
    $region59: #{tpu_custom_call.1} parent=1 // pred_check_branch
      %520 = sbr.rel (0) target = $region61
    $region60: #{tpu_custom_call.1} parent=1 // pred_region
      %521 = dma.done [#allocation14], 16
    $region61: #{tpu_custom_call.1} parent=1 // pred_fallthru
      _
    %522 = vsyncpa [#allocation8], 1
    %523 = vsyncpa [#allocation11], 1
    %524 = vsyncpa [#allocation9], 1
    %525 = vsyncpa [#allocation14], 1
  %526 = vsyncmov [#allocation6]
  %s527 = vpop.sfrf %526
  %p528 = scmp.eq.s32.totalorder %s527, 0
  %p529 = pneg %p528
  %531 = shalt.err (%p529)
  %s532 = scalar_lea.sflag [#allocation6], 1
  %533 = vsyncmov %s532
  %s534 = vpop.sfrf %533
  %p535 = scmp.eq.s32.totalorder %s534, 0
  %p536 = pneg %p535
  %538 = shalt.err (%p536)
  %s539 = scalar_lea.sflag [#allocation6], 2
  %540 = vsyncmov %s539
  %s541 = vpop.sfrf %540
  %p542 = scmp.eq.s32.totalorder %s541, 0
  %p543 = pneg %p542
  %545 = shalt.err (%p543)
  %s546 = scalar_lea.sflag [#allocation6], 3
  %547 = vsyncmov %s546
  %s548 = vpop.sfrf %547
  %p549 = scmp.eq.s32.totalorder %s548, 0
  %p550 = pneg %p549
  %552 = shalt.err (%p550)

</llo_original>
